<compile_context>
chip_gen: v5e
topology: v5e:2x2
jax: 0.10.0
libtpu: 0.0.40
codegen_flags: <defaults>
</compile_context>

<pallas_src>
from functools import partial

import jax
import jax.numpy as jnp
from jax.experimental import pallas as pl
from jax.experimental.pallas import tpu as pltpu


# Safe on all generations; raise to 64-100 MiB on v6e (128 MiB physical VMEM) together
# with a larger strip height for big feature maps.
VMEM_LIMIT = 32 * 1024 * 1024


def _pick_strip_height(H, target=64):
    """Largest divisor of H that is a multiple of 8 and <= target (fallback: H)."""
    best = None
    for d in range(8, min(target, H) + 1, 8):
        if H % d == 0:
            best = d
    return best if best is not None else H


def conv_stats_kernel(xs_ref, t_ref, y_ref, st_ref):
    # xs_ref : (SH+2, Wp*Cin) bf16 -- one padded row strip (incl. 1-row halo each side),
    #                                 (W, Cin) flattened onto the lane axis.
    # t_ref  : (3, Wp*Cin, W*Cout) bf16 -- banded block-Toeplitz weight, one per ky tap.
    # y_ref  : (SH, W*Cout) bf16  -- conv output strip, lane-dense, bf16 intermediate.
    # st_ref : (2, W*Cout) f32    -- per-(batch, strip) partial sum / sum-of-squares,
    #                                still per output column (reduced over W/N in XLA).
    SH = y_ref.shape[0]

    # Three lane-dense MXU matmuls (one per kernel row).  No im2col reshape/concat;
    # the only relayout is a 0/1/2-row sublane shift of the bf16 strip.
    acc = jnp.dot(xs_ref[0:SH, :], t_ref[0], preferred_element_type=jnp.float32)
    acc += jnp.dot(xs_ref[1:SH + 1, :], t_ref[1], preferred_element_type=jnp.float32)
    acc += jnp.dot(xs_ref[2:SH + 2, :], t_ref[2], preferred_element_type=jnp.float32)

    # Lane-dense bf16 store of the conv intermediate.
    y_ref[...] = acc.astype(y_ref.dtype)

    # BatchNorm partial statistics straight from the f32 accumulator (row reduction
    # only; the tiny W-wise / N-wise reductions happen in XLA).  Writing per-strip
    # partials keeps every grid step's outputs disjoint -> both axes "parallel".
    ssum = jnp.sum(acc, axis=0, keepdims=True)          # (1, W*Cout)
    ssq = jnp.sum(acc * acc, axis=0, keepdims=True)     # (1, W*Cout)
    st_ref[...] = jnp.concatenate([ssum, ssq], axis=0)  # (2, W*Cout)


def bn_relu_kernel(y_ref, scale_ref, shift_ref, o_ref):
    # y_ref : (SH, W*Cout) bf16, scale/shift : (1, W*Cout) f32, o_ref : (SH, W*Cout) f32.
    y = y_ref[...].astype(jnp.float32)
    o_ref[...] = jnp.maximum(y * scale_ref[...] + shift_ref[...], 0.0)


@partial(jax.jit, static_argnames=("eps",))
def conv_bn_relu_forward(x, w_oihw, gamma, beta, eps=1e-5):
    """x: (N, Cin, H, W) f32 (PyTorch NCHW); w_oihw: (Cout, Cin, 3, 3)."""
    N, Cin, H, W = x.shape
    Cout = w_oihw.shape[0]
    Wp = W + 2

    SH = _pick_strip_height(H)
    n_strips = H // SH
    # TODO(synk): for heights with no multiple-of-8 divisor, pad H to a multiple of SH
    # and mask the padded rows out of the BN statistics instead of falling back to SH=H.

    # ---- wrapper-side layout prep (one fused XLA pass over x) ---------------------
    # NCHW -> NHWC, 1-pixel zero pad, then gather overlapping (SH+2)-row strips so the
    # kernel's x blocks are strip-sized (not whole images) and auto-pipeline.
    xp = jnp.pad(jnp.transpose(x, (0, 2, 3, 1)),
                 ((0, 0), (1, 1), (1, 1), (0, 0)))                   # (N, H+2, Wp, Cin)
    row_idx = jnp.arange(n_strips)[:, None] * SH + jnp.arange(SH + 2)[None, :]
    xs = xp[:, row_idx]                                              # (N, n_strips, SH+2, Wp, Cin)
    xs = xs.reshape(N, n_strips, SH + 2, Wp * Cin).astype(jnp.bfloat16)

    # Banded block-Toeplitz weights: T[ky, wp*Cin+ci, w*Cout+co] = W[co, ci, ky, wp-w]
    # for wp-w in [0, 2], else 0.  Built once; tiny.
    w_hwio = jnp.transpose(w_oihw, (2, 3, 1, 0))                     # (3, 3, Cin, Cout)
    kx = jnp.arange(Wp)[:, None] - jnp.arange(W)[None, :]            # (Wp, W)
    valid = (kx >= 0) & (kx <= 2)
    g = w_hwio[:, jnp.clip(kx, 0, 2)]                                # (3, Wp, W, Cin, Cout)
    t5 = jnp.where(valid[None, :, :, None, None], g, 0.0)
    t = jnp.transpose(t5, (0, 1, 3, 2, 4)).reshape(3, Wp * Cin, W * Cout)
    t = t.astype(jnp.bfloat16)

    # ---- pass 1: conv (3 lane-dense matmuls) + per-strip BN partial stats ---------
    y, stats = pl.pallas_call(
        conv_stats_kernel,
        out_shape=(
            jax.ShapeDtypeStruct((N, H, W * Cout), jnp.bfloat16),
            jax.ShapeDtypeStruct((N, n_strips, 2, W * Cout), jnp.float32),
        ),
        grid_spec=pltpu.PrefetchScalarGridSpec(
            num_scalar_prefetch=0,
            grid=(N, n_strips),
            in_specs=[
                pl.BlockSpec((None, None, SH + 2, Wp * Cin), lambda n, s: (n, s, 0, 0)),
                pl.BlockSpec((3, Wp * Cin, W * Cout), lambda n, s: (0, 0, 0)),
            ],
            out_specs=[
                pl.BlockSpec((None, SH, W * Cout), lambda n, s: (n, s, 0)),
                pl.BlockSpec((None, None, 2, W * Cout), lambda n, s: (n, s, 0, 0)),
            ],
        ),
        compiler_params=pltpu.CompilerParams(
            dimension_semantics=("parallel", "parallel"),
            vmem_limit_bytes=VMEM_LIMIT,
        ),
    )(xs, t)

    # ---- BatchNorm2d training-mode batch statistics (tiny, done in XLA) -----------
    count = float(N * H * W)
    ssum = jnp.sum(stats[:, :, 0, :], axis=(0, 1)).reshape(W, Cout).sum(axis=0)
    ssq = jnp.sum(stats[:, :, 1, :], axis=(0, 1)).reshape(W, Cout).sum(axis=0)
    mean = ssum / count
    var = jnp.maximum(ssq / count - mean * mean, 0.0)   # clamp against f32 cancellation
    inv = jax.lax.rsqrt(var + eps)
    scale = gamma * inv
    shift = beta - mean * scale
    scale_t = jnp.tile(scale, W).reshape(1, W * Cout)
    shift_t = jnp.tile(shift, W).reshape(1, W * Cout)

    # ---- pass 2: BN apply + ReLU, strip-tiled, lane-dense --------------------------
    out = pl.pallas_call(
        bn_relu_kernel,
        out_shape=jax.ShapeDtypeStruct((N, H, W * Cout), jnp.float32),
        grid_spec=pltpu.PrefetchScalarGridSpec(
            num_scalar_prefetch=0,
            grid=(N, n_strips),
            in_specs=[
                pl.BlockSpec((None, SH, W * Cout), lambda n, s: (n, s, 0)),
                pl.BlockSpec((1, W * Cout), lambda n, s: (0, 0)),
                pl.BlockSpec((1, W * Cout), lambda n, s: (0, 0)),
            ],
            out_specs=pl.BlockSpec((None, SH, W * Cout), lambda n, s: (n, s, 0)),
        ),
        compiler_params=pltpu.CompilerParams(
            dimension_semantics=("parallel", "parallel"),
            vmem_limit_bytes=VMEM_LIMIT,
        ),
    )(y, scale_t, shift_t)

    # TODO(synk): keep activations NHWC across layers and drop this transpose if the
    # downstream consumer allows it (saves a full HBM pass).
    out = out.reshape(N, H, W, Cout)
    return jnp.transpose(out, (0, 3, 1, 2))   # back to NCHW


def reference_forward(x, w_oihw, gamma, beta, eps=1e-5):
    # Matches the kernel's precision policy: bf16 conv operands with f32 accumulation,
    # f32 batch statistics, conv intermediate rounded to bf16 before the BN affine.
    y = jax.lax.conv_general_dilated(
        x.astype(jnp.bfloat16), w_oihw.astype(jnp.bfloat16),
        window_strides=(1, 1), padding="SAME",
        dimension_numbers=("NCHW", "OIHW", "NCHW"),
        preferred_element_type=jnp.float32,
    )
    mean = jnp.mean(y, axis=(0, 2, 3), keepdims=True)
    var = jnp.mean((y - mean) ** 2, axis=(0, 2, 3), keepdims=True)
    scale = gamma.reshape(1, -1, 1, 1) * jax.lax.rsqrt(var + eps)
    shift = beta.reshape(1, -1, 1, 1) - mean * scale
    yq = y.astype(jnp.bfloat16).astype(jnp.float32)   # bf16 intermediate, like the kernel
    return jnp.maximum(yq * scale + shift, 0.0)


if __name__ == "__main__":
    N, Cin, H, W = 2, 4, 16, 16
    Cout = 8

    key = jax.random.PRNGKey(0)
    k1, k2, k3, k4 = jax.random.split(key, 4)

    x = jax.random.normal(k1, (N, Cin, H, W), jnp.float32)
    w_oihw = jax.random.normal(k2, (Cout, Cin, 3, 3), jnp.float32) * 0.2
    gamma = 1.0 + 0.1 * jax.random.normal(k3, (Cout,), jnp.float32)
    beta = 0.1 * jax.random.normal(k4, (Cout,), jnp.float32)

    out = conv_bn_relu_forward(x, w_oihw, gamma, beta)
    out = jax.block_until_ready(out)

    ref = reference_forward(x, w_oihw, gamma, beta)
    assert out.shape == (N, Cout, H, W)
    err = float(jnp.max(jnp.abs(out - ref)))
    assert err < 2e-3, err

    print("KERNEL_OK")
</pallas_src>

<mosaic_0001>
module attributes {stable_mosaic.version = 11 : i64} {
  func.func @conv_stats_kernel(%arg0: i32, %arg1: i32, %arg2: memref<1x1x18x72xbf16, #tpu.memory_space<vmem>>, %arg3: memref<3x72x128xbf16, #tpu.memory_space<vmem>>, %arg4: memref<1x16x128xbf16, #tpu.memory_space<vmem>>, %arg5: memref<1x1x2x128xf32, #tpu.memory_space<vmem>>) attributes {dimension_semantics = [#tpu.dimension_semantics<parallel>, #tpu.dimension_semantics<parallel>], iteration_bounds = array<i64: 2, 1>, scalar_prefetch = 0 : i64, scratch_operands = 0 : i64, tpu.core_type = #tpu.core_type<tc>, window_params = [{transform_indices = @transform_0, window_bounds = array<i64: 1, 1, 18, 72>}, {pipeline_mode = #tpu.pipeline_mode<synchronous>, transform_indices = @transform_1, window_bounds = array<i64: 3, 72, 128>}, {transform_indices = @transform_2, window_bounds = array<i64: 1, 16, 128>}, {transform_indices = @transform_3, window_bounds = array<i64: 1, 1, 2, 128>}]} {
    %c0 = arith.constant 0 : index
    %c0_0 = arith.constant 0 : index
    %c0_1 = arith.constant 0 : index
    %c0_2 = arith.constant 0 : index
    %0 = vector.load %arg2[%c0, %c0_0, %c0_1, %c0_2] : memref<1x1x18x72xbf16, #tpu.memory_space<vmem>>, vector<1x1x16x72xbf16>
    %1 = vector.shape_cast %0 : vector<1x1x16x72xbf16> to vector<16x72xbf16>
    %c0_3 = arith.constant 0 : index
    %c0_4 = arith.constant 0 : index
    %c0_5 = arith.constant 0 : index
    %2 = vector.load %arg3[%c0_3, %c0_4, %c0_5] : memref<3x72x128xbf16, #tpu.memory_space<vmem>>, vector<1x72x128xbf16>
    %3 = vector.shape_cast %2 : vector<1x72x128xbf16> to vector<72x128xbf16>
    %cst = arith.constant dense<0.000000e+00> : vector<16x128xf32>
    %4 = tpu.matmul %1, %3, %cst {dimension_numbers = #tpu.dot_dimension_numbers<[1], [0], [0], [1], [0, 0, 1, 1], [], []>} : vector<16x72xbf16>, vector<72x128xbf16>, vector<16x128xf32> -> vector<16x128xf32>
    %c0_6 = arith.constant 0 : index
    %c0_7 = arith.constant 0 : index
    %c1 = arith.constant 1 : index
    %c0_8 = arith.constant 0 : index
    %5 = vector.load %arg2[%c0_6, %c0_7, %c1, %c0_8] : memref<1x1x18x72xbf16, #tpu.memory_space<vmem>>, vector<1x1x16x72xbf16>
    %6 = vector.shape_cast %5 : vector<1x1x16x72xbf16> to vector<16x72xbf16>
    %c1_9 = arith.constant 1 : index
    %c0_10 = arith.constant 0 : index
    %c0_11 = arith.constant 0 : index
    %7 = vector.load %arg3[%c1_9, %c0_10, %c0_11] : memref<3x72x128xbf16, #tpu.memory_space<vmem>>, vector<1x72x128xbf16>
    %8 = vector.shape_cast %7 : vector<1x72x128xbf16> to vector<72x128xbf16>
    %cst_12 = arith.constant dense<0.000000e+00> : vector<16x128xf32>
    %9 = tpu.matmul %6, %8, %cst_12 {dimension_numbers = #tpu.dot_dimension_numbers<[1], [0], [0], [1], [0, 0, 1, 1], [], []>} : vector<16x72xbf16>, vector<72x128xbf16>, vector<16x128xf32> -> vector<16x128xf32>
    %10 = arith.addf %4, %9 : vector<16x128xf32>
    %c0_13 = arith.constant 0 : index
    %c0_14 = arith.constant 0 : index
    %c2 = arith.constant 2 : index
    %c0_15 = arith.constant 0 : index
    %11 = vector.load %arg2[%c0_13, %c0_14, %c2, %c0_15] : memref<1x1x18x72xbf16, #tpu.memory_space<vmem>>, vector<1x1x16x72xbf16>
    %12 = vector.shape_cast %11 : vector<1x1x16x72xbf16> to vector<16x72xbf16>
    %c2_16 = arith.constant 2 : index
    %c0_17 = arith.constant 0 : index
    %c0_18 = arith.constant 0 : index
    %13 = vector.load %arg3[%c2_16, %c0_17, %c0_18] : memref<3x72x128xbf16, #tpu.memory_space<vmem>>, vector<1x72x128xbf16>
    %14 = vector.shape_cast %13 : vector<1x72x128xbf16> to vector<72x128xbf16>
    %cst_19 = arith.constant dense<0.000000e+00> : vector<16x128xf32>
    %15 = tpu.matmul %12, %14, %cst_19 {dimension_numbers = #tpu.dot_dimension_numbers<[1], [0], [0], [1], [0, 0, 1, 1], [], []>} : vector<16x72xbf16>, vector<72x128xbf16>, vector<16x128xf32> -> vector<16x128xf32>
    %16 = arith.addf %10, %15 : vector<16x128xf32>
    %17 = arith.truncf %16 : vector<16x128xf32> to vector<16x128xbf16>
    %c0_20 = arith.constant 0 : index
    %c0_21 = arith.constant 0 : index
    %c0_22 = arith.constant 0 : index
    %18 = vector.load %arg4[%c0_20, %c0_21, %c0_22] : memref<1x16x128xbf16, #tpu.memory_space<vmem>>, vector<1x16x128xbf16>
    %19 = vector.shape_cast %18 : vector<1x16x128xbf16> to vector<16x128xbf16>
    %20 = vector.shape_cast %17 : vector<16x128xbf16> to vector<1x16x128xbf16>
    tpu.vector_store %arg4[%c0_20, %c0_21, %c0_22], %20 {strides = array<i32>} : memref<1x16x128xbf16, #tpu.memory_space<vmem>>, vector<1x16x128xbf16>,
    %cst_23 = arith.constant dense<0.000000e+00> : vector<128xf32>
    %21 = vector.multi_reduction <add>, %16, %cst_23 [0] : vector<16x128xf32> to vector<128xf32>
    %22 = vector.shape_cast %21 : vector<128xf32> to vector<1x128xf32>
    %23 = arith.mulf %16, %16 : vector<16x128xf32>
    %cst_24 = arith.constant dense<0.000000e+00> : vector<128xf32>
    %24 = vector.multi_reduction <add>, %23, %cst_24 [0] : vector<16x128xf32> to vector<128xf32>
    %25 = vector.shape_cast %24 : vector<128xf32> to vector<1x128xf32>
    %26 = tpu.concatenate %22, %25 in 0 : vector<1x128xf32>, vector<1x128xf32> -> vector<2x128xf32>
    %c0_25 = arith.constant 0 : index
    %c0_26 = arith.constant 0 : index
    %c0_27 = arith.constant 0 : index
    %c0_28 = arith.constant 0 : index
    %27 = vector.load %arg5[%c0_25, %c0_26, %c0_27, %c0_28] : memref<1x1x2x128xf32, #tpu.memory_space<vmem>>, vector<1x1x2x128xf32>
    %28 = vector.shape_cast %27 : vector<1x1x2x128xf32> to vector<2x128xf32>
    %29 = vector.shape_cast %26 : vector<2x128xf32> to vector<1x1x2x128xf32>
    tpu.vector_store %arg5[%c0_25, %c0_26, %c0_27, %c0_28], %29 {strides = array<i32>} : memref<1x1x2x128xf32, #tpu.memory_space<vmem>>, vector<1x1x2x128xf32>,
    return
  }
  func.func @transform_0(%arg0: i32, %arg1: i32) -> (i32, i32, i32, i32) {
    %c0_i32 = arith.constant 0 : i32
    %c0_i32_0 = arith.constant 0 : i32
    %c0_i32_1 = arith.constant 0 : i32
    return %arg0, %arg1, %c0_i32, %c0_i32_0 : i32, i32, i32, i32
  }
  func.func @transform_1(%arg0: i32, %arg1: i32) -> (i32, i32, i32) {
    %c0_i32 = arith.constant 0 : i32
    %c0_i32_0 = arith.constant 0 : i32
    %c0_i32_1 = arith.constant 0 : i32
    %c0_i32_2 = arith.constant 0 : i32
    return %c0_i32, %c0_i32_0, %c0_i32_1 : i32, i32, i32
  }
  func.func @transform_2(%arg0: i32, %arg1: i32) -> (i32, i32, i32) {
    %c0_i32 = arith.constant 0 : i32
    %c0_i32_0 = arith.constant 0 : i32
    return %arg0, %arg1, %c0_i32 : i32, i32, i32
  }
  func.func @transform_3(%arg0: i32, %arg1: i32) -> (i32, i32, i32, i32) {
    %c0_i32 = arith.constant 0 : i32
    %c0_i32_0 = arith.constant 0 : i32
    %c0_i32_1 = arith.constant 0 : i32
    return %arg0, %arg1, %c0_i32, %c0_i32_0 : i32, i32, i32, i32
  }
}

module attributes {stable_mosaic.version = 11 : i64} {
  func.func @bn_relu_kernel(%arg0: i32, %arg1: i32, %arg2: memref<1x16x128xbf16, #tpu.memory_space<vmem>>, %arg3: memref<1x128xf32, #tpu.memory_space<vmem>>, %arg4: memref<1x128xf32, #tpu.memory_space<vmem>>, %arg5: memref<1x16x128xf32, #tpu.memory_space<vmem>>) attributes {dimension_semantics = [#tpu.dimension_semantics<parallel>, #tpu.dimension_semantics<parallel>], iteration_bounds = array<i64: 2, 1>, scalar_prefetch = 0 : i64, scratch_operands = 0 : i64, tpu.core_type = #tpu.core_type<tc>, window_params = [{transform_indices = @transform_0, window_bounds = array<i64: 1, 16, 128>}, {pipeline_mode = #tpu.pipeline_mode<synchronous>, transform_indices = @transform_1, window_bounds = array<i64: 1, 128>}, {pipeline_mode = #tpu.pipeline_mode<synchronous>, transform_indices = @transform_2, window_bounds = array<i64: 1, 128>}, {transform_indices = @transform_3, window_bounds = array<i64: 1, 16, 128>}]} {
    %c0 = arith.constant 0 : index
    %c0_0 = arith.constant 0 : index
    %c0_1 = arith.constant 0 : index
    %0 = vector.load %arg2[%c0, %c0_0, %c0_1] : memref<1x16x128xbf16, #tpu.memory_space<vmem>>, vector<1x16x128xbf16>
    %1 = vector.shape_cast %0 : vector<1x16x128xbf16> to vector<16x128xbf16>
    %2 = arith.extf %1 : vector<16x128xbf16> to vector<16x128xf32>
    %c0_2 = arith.constant 0 : index
    %c0_3 = arith.constant 0 : index
    %3 = vector.load %arg3[%c0_2, %c0_3] : memref<1x128xf32, #tpu.memory_space<vmem>>, vector<1x128xf32>
    %4 = vector.broadcast %3 : vector<1x128xf32> to vector<16x128xf32>
    %5 = arith.mulf %2, %4 : vector<16x128xf32>
    %c0_4 = arith.constant 0 : index
    %c0_5 = arith.constant 0 : index
    %6 = vector.load %arg4[%c0_4, %c0_5] : memref<1x128xf32, #tpu.memory_space<vmem>>, vector<1x128xf32>
    %7 = vector.broadcast %6 : vector<1x128xf32> to vector<16x128xf32>
    %8 = arith.addf %5, %7 : vector<16x128xf32>
    %cst = arith.constant 0.000000e+00 : f32
    %9 = vector.broadcast %cst : f32 to vector<16x128xf32>
    %10 = arith.maximumf %8, %9 : vector<16x128xf32>
    %c0_6 = arith.constant 0 : index
    %c0_7 = arith.constant 0 : index
    %c0_8 = arith.constant 0 : index
    %11 = vector.load %arg5[%c0_6, %c0_7, %c0_8] : memref<1x16x128xf32, #tpu.memory_space<vmem>>, vector<1x16x128xf32>
    %12 = vector.shape_cast %11 : vector<1x16x128xf32> to vector<16x128xf32>
    %13 = vector.shape_cast %10 : vector<16x128xf32> to vector<1x16x128xf32>
    tpu.vector_store %arg5[%c0_6, %c0_7, %c0_8], %13 {strides = array<i32>} : memref<1x16x128xf32, #tpu.memory_space<vmem>>, vector<1x16x128xf32>,
    return
  }
  func.func @transform_0(%arg0: i32, %arg1: i32) -> (i32, i32, i32) {
    %c0_i32 = arith.constant 0 : i32
    %c0_i32_0 = arith.constant 0 : i32
    return %arg0, %arg1, %c0_i32 : i32, i32, i32
  }
  func.func @transform_1(%arg0: i32, %arg1: i32) -> (i32, i32) {
    %c0_i32 = arith.constant 0 : i32
    %c0_i32_0 = arith.constant 0 : i32
    %c0_i32_1 = arith.constant 0 : i32
    return %c0_i32, %c0_i32_0 : i32, i32
  }
  func.func @transform_2(%arg0: i32, %arg1: i32) -> (i32, i32) {
    %c0_i32 = arith.constant 0 : i32
    %c0_i32_0 = arith.constant 0 : i32
    %c0_i32_1 = arith.constant 0 : i32
    return %c0_i32, %c0_i32_0 : i32, i32
  }
  func.func @transform_3(%arg0: i32, %arg1: i32) -> (i32, i32, i32) {
    %c0_i32 = arith.constant 0 : i32
    %c0_i32_0 = arith.constant 0 : i32
    return %arg0, %arg1, %c0_i32 : i32, i32, i32
  }
}

</mosaic_0001>

<llo_original>
// kernel: conv_bn_relu_forward.2
$region0: #{conv_bn_relu_forward.2}
  #allocation0 [shape = 'u32[]', space=smem, size = 0x4, offset = 0x4, fixed_abs, tag = 'smem constant byte address 0x4 - core index']
  #allocation1 [shape = 'u32[72,128]{1,0:T(1,128)}', space=vmem, size = 0x9000, scoped, tag = 'internal scratch']
  %s0 = inlined_call_operand.vmem [shape: bf16[2,1,18,72], index: 0, kind: input, shape index: {}]
  %s1 = inlined_call_operand.vmem [shape: bf16[3,72,128], index: 1, kind: input, shape index: {}]
  %s2 = inlined_call_operand.vmem [shape: bf16[2,16,128], index: 2, kind: output, shape index: {0}]
  %s3 = inlined_call_operand.vmem [shape: f32[2,1,2,128], index: 3, kind: output, shape index: {1}]
  %4 = xla_tuple %s2, %s3
  %s5 = sld [smem:[#allocation0]]
  $region49: #{conv_bn_relu_forward.2} parent=0
    _
  %s7 = ssub.s32 1, %s5
  %s8 = scalar_select 0, %s7, %s5
  loop: start=0, step=1, limit=4
  $region2: #{conv_bn_relu_forward.2} parent=0 // loop_pre_header
    _
  $region3: #{conv_bn_relu_forward.2} parent=0 // loop_header
    %s10 = sphi 0, %s14
    %p11 = scmp.ge.s32.totalorder %s10, 4
    %s17 = sphi 0, %s29
    %s18 = sphi 0, %s25
    %s19 = sphi 0, %s17
    %s20 = sphi 0, %s18
    %s21 = sphi 0, %s19
    %s22 = sphi 0, %s20
    %s34 = sphi 0, %s36
    %s37 = sphi 0, %s34
    %s38 = sphi 0, %s37
    %s54 = sphi 0, %s38
    %s58 = sphi 0, %s58
    %s60 = sphi 0, %s58
    %s61 = sphi 0, %s60
    %s75 = sphi 0, %s61
    %s83 = sphi 0, %s85
    %s86 = sphi 0, %s83
    %s87 = sphi 0, %s86
    %s103 = sphi 0, %s87
    %s111 = sphi 0, %s113
    %s114 = sphi 0, %s111
    %s115 = sphi 0, %s114
    %s131 = sphi 0, %s115
  $region4: #{conv_bn_relu_forward.2} parent=0 // loop_header_branch
    %13 = sbr.rel (%p11) target = $region8
  $region5: #{conv_bn_relu_forward.2} parent=0 // loop_body
    %s15 = ssub.s32 %s10, 1
    %s16 = ssub.s32 %s10, 2
    %s23 = sadd.s32 1, %s18
    %p24 = scmp.ge.s32.totalorder %s23, 1
    %s25 = scalar_select %p24, 0, %s23
    %s26 = sadd.s32 1, %s17
    %s27 = scalar_select %p24, %s26, %s17
    %p28 = scmp.ge.s32.totalorder %s27, 2
    %s29 = scalar_select %p28, 0, %s27
    %s30 = ssub.s32 %s17, %s29
    %s31 = ssub.s32 %s18, %s25
    %s32 = sor.u32 %s30, %s31
    %p33 = scmp.eq.s32.totalorder %s32, 0
    %s35 = sadd.s32 %s34, 1
    %s36 = scalar_select %p33, %s34, %s35
    %p39 = pneg %p33
    %p40 = scmp.eq.s32.totalorder %s10, 1
    %p41 = por %p39, %p40
    %p42 = scmp.ne.s32.totalorder %s34, %s37
    %p43 = scmp.eq.s32.totalorder %s10, 0
    %p44 = por %p42, %p43
    %p45 = scmp.ne.s32.totalorder %s34, %s37
    %p46 = scmp.eq.s32.totalorder %s15, 1
    %p47 = por %p45, %p46
    %p48 = scmp.ne.s32.totalorder %s37, %s38
    %p49 = scmp.eq.s32.totalorder %s15, 0
    %p50 = por %p48, %p49
    %p51 = scmp.ne.s32.totalorder %s37, %s38
    %p52 = scmp.eq.s32.totalorder %s16, 1
    %p53 = por %p51, %p52
    %p55 = scmp.ne.s32.totalorder %s38, %s54
    %p56 = scmp.eq.s32.totalorder %s16, 0
    %p57 = por %p55, %p56
    %s59 = sadd.s32 %s58, 1
    %p62 = scmp.eq.s32.totalorder %s10, 1
    %p63 = scmp.ne.s32.totalorder %s58, %s60
    %p64 = scmp.eq.s32.totalorder %s10, 0
    %p65 = por %p63, %p64
    %p66 = scmp.ne.s32.totalorder %s58, %s60
    %p67 = scmp.eq.s32.totalorder %s15, 1
    %p68 = por %p66, %p67
    %p69 = scmp.ne.s32.totalorder %s60, %s61
    %p70 = scmp.eq.s32.totalorder %s15, 0
    %p71 = por %p69, %p70
    %p72 = scmp.ne.s32.totalorder %s60, %s61
    %p73 = scmp.eq.s32.totalorder %s16, 1
    %p74 = por %p72, %p73
    %p76 = scmp.ne.s32.totalorder %s61, %s75
    %p77 = scmp.eq.s32.totalorder %s16, 0
    %p78 = por %p76, %p77
    %s79 = ssub.s32 %s17, %s29
    %s80 = ssub.s32 %s18, %s25
    %s81 = sor.u32 %s79, %s80
    %p82 = scmp.eq.s32.totalorder %s81, 0
    %s84 = sadd.s32 %s83, 1
    %s85 = scalar_select %p82, %s83, %s84
    %p88 = pneg %p82
    %p89 = scmp.eq.s32.totalorder %s10, 1
    %p90 = por %p88, %p89
    %p91 = scmp.ne.s32.totalorder %s83, %s86
    %p92 = scmp.eq.s32.totalorder %s10, 0
    %p93 = por %p91, %p92
    %p94 = scmp.ne.s32.totalorder %s83, %s86
    %p95 = scmp.eq.s32.totalorder %s15, 1
    %p96 = por %p94, %p95
    %p97 = scmp.ne.s32.totalorder %s86, %s87
    %p98 = scmp.eq.s32.totalorder %s15, 0
    %p99 = por %p97, %p98
    %p100 = scmp.ne.s32.totalorder %s86, %s87
    %p101 = scmp.eq.s32.totalorder %s16, 1
    %p102 = por %p100, %p101
    %p104 = scmp.ne.s32.totalorder %s87, %s103
    %p105 = scmp.eq.s32.totalorder %s16, 0
    %p106 = por %p104, %p105
    %s107 = ssub.s32 %s17, %s29
    %s108 = ssub.s32 %s18, %s25
    %s109 = sor.u32 %s107, %s108
    %p110 = scmp.eq.s32.totalorder %s109, 0
    %s112 = sadd.s32 %s111, 1
    %s113 = scalar_select %p110, %s111, %s112
    %p116 = pneg %p110
    %p117 = scmp.eq.s32.totalorder %s10, 1
    %p118 = por %p116, %p117
    %p119 = scmp.ne.s32.totalorder %s111, %s114
    %p120 = scmp.eq.s32.totalorder %s10, 0
    %p121 = por %p119, %p120
    %p122 = scmp.ne.s32.totalorder %s111, %s114
    %p123 = scmp.eq.s32.totalorder %s15, 1
    %p124 = por %p122, %p123
    %p125 = scmp.ne.s32.totalorder %s114, %s115
    %p126 = scmp.eq.s32.totalorder %s15, 0
    %p127 = por %p125, %p126
    %p128 = scmp.ne.s32.totalorder %s114, %s115
    %p129 = scmp.eq.s32.totalorder %s16, 1
    %p130 = por %p128, %p129
    %p132 = scmp.ne.s32.totalorder %s115, %s131
    %p133 = scmp.eq.s32.totalorder %s16, 0
    %p134 = por %p132, %p133
    %p135 = scmp.le.s32.totalorder 1, %s10
    %p136 = scmp.lt.s32.totalorder %s10, 3
    %p137 = pnand %p135, %p136
    %p138 = pneg %p137
    // Predicated region
    $region9: #{conv_bn_relu_forward.2} parent=5 // pred_check
      _
    $region10: #{conv_bn_relu_forward.2} parent=5 // pred_check_branch
      %140 = sbr.rel (%p137) target = $region12
    $region11: #{conv_bn_relu_forward.2} parent=5 // pred_region
      %s141 = ssub.s32 %s10, 1
      // Predicated region
      $region13: #{conv_bn_relu_forward.2} parent=11 // pred_check
        %p142 = pneg %p71
      $region14: #{conv_bn_relu_forward.2} parent=11 // pred_check_branch
        %144 = sbr.rel (%p142) target = $region16
      $region15: #{conv_bn_relu_forward.2} parent=11 // pred_region
        _
      $region16: #{conv_bn_relu_forward.2} parent=11 // pred_fallthru
        _
    $region12: #{conv_bn_relu_forward.2} parent=5 // pred_fallthru
      _
    %p145 = scmp.lt.s32.totalorder %s10, 2
    // Predicated region
    $region17: #{conv_bn_relu_forward.2} parent=5 // pred_check
      %p146 = pneg %p145
    $region18: #{conv_bn_relu_forward.2} parent=5 // pred_check_branch
      %148 = sbr.rel (%p146) target = $region20
    $region19: #{conv_bn_relu_forward.2} parent=5 // pred_region
      // Predicated region
      $region21: #{conv_bn_relu_forward.2} parent=19 // pred_check
        %p149 = pneg %p44
      $region22: #{conv_bn_relu_forward.2} parent=19 // pred_check_branch
        %151 = sbr.rel (%p149) target = $region24
      $region23: #{conv_bn_relu_forward.2} parent=19 // pred_region
        %p152 = scmp.lt.s32.totalorder %s17, 1
        %s153 = scalar_select %p152, %s17, 1
        %p154 = scmp.lt.s32.totalorder %s18, 0
        %s155 = scalar_select %p154, %s18, 0
        %s156 = smul.addr %s155, 3
        %s157 = smul.addr %s153, 3
        %s158 = sadd.s32 %s156, %s157
        %s159 = smul.addr %s158, 4
        %s160 = scalar_lea.vmem %s0, %s159
      $region24: #{conv_bn_relu_forward.2} parent=19 // pred_fallthru
        _
    $region20: #{conv_bn_relu_forward.2} parent=5 // pred_fallthru
      _
    %p161 = scmp.le.s32.totalorder 1, %s10
    %p162 = scmp.lt.s32.totalorder %s10, 3
    %p163 = pnand %p161, %p162
    %p164 = pneg %p163
    // Predicated region
    $region25: #{conv_bn_relu_forward.2} parent=5 // pred_check
      _
    $region26: #{conv_bn_relu_forward.2} parent=5 // pred_check_branch
      %166 = sbr.rel (%p163) target = $region28
    $region27: #{conv_bn_relu_forward.2} parent=5 // pred_region
      %s167 = ssub.s32 %s10, 1
      %p168 = scmp.lt.s32.totalorder %s19, 1
      %s169 = scalar_select %p168, %s19, 1
      %p170 = scmp.lt.s32.totalorder %s20, 0
      %s171 = scalar_select %p170, %s20, 0
      %s172 = smul.addr %s171, 3
      %s173 = smul.addr %s169, 3
      %s174 = sadd.s32 %s172, %s173
      %s175 = smul.addr %s174, 4
      %s176 = scalar_lea.vmem %s0, %s175
      %p177 = pneg %p50
      %p178 = pneg %p47
      %p179 = pneg %p71
      %p180 = pneg %p68
      %p181 = pneg %p99
      %p182 = pneg %p96
      %s183 = smul.u32 2, %s20
      %p184 = scmp.lt.s32.totalorder %s19, 1
      %s185 = scalar_select %p184, %s19, 1
      %p186 = scmp.lt.s32.totalorder %s183, 1
      %s187 = scalar_select %p186, %s183, 1
      %s188 = smul.addr %s185, 2
      %s189 = sadd.s32 %s187, %s188
      %s190 = smul.addr %s189, 4
      %s191 = scalar_lea.vmem %s2, %s190
      %p192 = pneg %p127
      %p193 = pneg %p124
      %p194 = scmp.lt.s32.totalorder %s19, 1
      %s195 = scalar_select %p194, %s19, 1
      %p196 = scmp.lt.s32.totalorder %s20, 0
      %s197 = scalar_select %p196, %s20, 0
      %s198 = sadd.s32 %s197, %s195
      %s199 = smul.addr %s198, 2
      %s200 = scalar_lea.vmem %s3, %s199
      %p201 = scmp.lt.s32.totalorder %s19, 1
      %s202 = scalar_select %p201, %s19, 1
      %p203 = scmp.lt.s32.totalorder %s20, 0
      %s204 = scalar_select %p203, %s20, 0
      %s205 = smul.addr %s204, 3
      %s206 = smul.addr %s202, 3
      %s207 = sadd.s32 %s205, %s206
      %s208 = smul.addr %s207, 4
      %s209 = scalar_lea.vmem %s0, %s208
      %s210 = smul.u32 2, %s20
      %p211 = scmp.lt.s32.totalorder %s19, 1
      %s212 = scalar_select %p211, %s19, 1
      %p213 = scmp.lt.s32.totalorder %s210, 1
      %s214 = scalar_select %p213, %s210, 1
      %s215 = smul.addr %s212, 2
      %s216 = sadd.s32 %s214, %s215
      %s217 = smul.addr %s216, 4
      %s218 = scalar_lea.vmem %s2, %s217
      %s219 = smul.u32 2, %s20
      %p220 = scmp.lt.s32.totalorder %s19, 1
      %s221 = scalar_select %p220, %s19, 1
      %p222 = scmp.lt.s32.totalorder %s20, 0
      %s223 = scalar_select %p222, %s20, 0
      %s224 = sadd.s32 %s223, %s221
      %s225 = smul.addr %s224, 2
      %s226 = scalar_lea.vmem %s3, %s225
      %v228 = vld [vmem:[%s209] sm:$0xf]
      %v229 = vld [vmem:[%s209 + $0x4] sm:$0xf]
      %v230 = vld [vmem:[%s1] sm:$0xf]
      %v231 = vld [vmem:[%s1 + $0x4] sm:$0xf]
      %v232 = vld [vmem:[%s1 + $0x8] sm:$0xf]
      %v233 = vld [vmem:[%s1 + $0xc] sm:$0xf]
      %v234 = vld [vmem:[%s1 + $0x10] sm:$0xf]
      %v235 = vld [vmem:[%s1 + $0x14] sm:$0xf]
      %v236 = vld [vmem:[%s1 + $0x18] sm:$0xf]
      %v237 = vld [vmem:[%s1 + $0x1c] sm:$0xf]
      %v238 = vld [vmem:[%s1 + $0x20] sm:$0xf]
      %v239 = vld [vmem:[%s209 + $0x8] sm:$0x1]
      %s240 = scalar_lea.vmem %s1, 36
      %v241 = vld [vmem:[%s240] sm:$0xf]
      %v242 = vld [vmem:[%s240 + $0x4] sm:$0xf]
      %v243 = vld [vmem:[%s240 + $0x8] sm:$0xf]
      %v244 = vld [vmem:[%s240 + $0xc] sm:$0xf]
      %v245 = vld [vmem:[%s240 + $0x10] sm:$0xf]
      %v246 = vld [vmem:[%s240 + $0x14] sm:$0xf]
      %v247 = vld [vmem:[%s240 + $0x18] sm:$0xf]
      %v248 = vld [vmem:[%s240 + $0x1c] sm:$0xf]
      %v249 = vld [vmem:[%s240 + $0x20] sm:$0xf]
      %v253 = vunpack.c.l.b16 %v228
      %v254 = vunpack.c.l.b16 %v229
      %v255 = vunpack.c.l.b16 %v239
      %v256 = vpack.c.b16 %v254, %v253
      %v257 = vpack.c.b16 %v255, %v255
      %vm258 = vsmask.f32 7424
      %v260 = vshrl.u32 %v256, 16
      %v262 = vshll.u32 %v256, 16
      %v264 = vrot.slane %v262, 1
      %v265 = vor.u32 %v260, %v264
      %v267 = vshll.u32 %v257, 16
      %v269 = vrot.slane %v267, 1
      %v270 = vsel %vm258, %v265, %v269
      %v280 = vunpack.c.l.b16 %v241
      %v281 = vunpack.c.l.b16 %v242
      %v282 = vunpack.c.l.b16 %v243
      %v283 = vunpack.c.l.b16 %v244
      %v284 = vunpack.c.l.b16 %v245
      %v285 = vunpack.c.l.b16 %v246
      %v286 = vunpack.c.l.b16 %v247
      %v287 = vunpack.c.l.b16 %v248
      %v288 = vunpack.c.l.b16 %v249
      %v289 = vpack.c.b16 %v281, %v280
      %v290 = vpack.c.b16 %v283, %v282
      %v291 = vpack.c.b16 %v285, %v284
      %v292 = vpack.c.b16 %v287, %v286
      %v293 = vpack.c.b16 %v288, %v288
      %vm298 = vcmask 588800
      %v300 = vsel %vm298, %v270, 0
      %vm302 = vcmask 1043456
      %v304 = vsel %vm302, %v293, 0
      %306 = vmatpush.bf16.msra.mxu0 0
      %307 = vmatpush.bf16.msra.mxu0 0
      %308 = vmatpush.bf16.msra.mxu0 0
      %309 = vmatpush.bf16.msra.mxu0 %v304
      %310 = vmatpush.bf16.msra.mxu0 %v292
      %311 = vmatpush.bf16.msra.mxu0 %v291
      %312 = vmatpush.bf16.msra.mxu0 %v290
      %313 = vmatpush.bf16.msra.mxu0 %v289
      %314 = vmatmul.bf16.gmra.mxu0 %v300
      %v315 = vpop.f32.mrf.mxu0
      %v316 = vadd.f32 0.0, %v315
      %v317 = vpop.f32.mrf.mxu0
      %v318 = vadd.f32 0.0, %v317
      %319 = vdwg.mxu0
      %v329 = vunpack.c.l.b16 %v230
      %v330 = vunpack.c.l.b16 %v231
      %v331 = vunpack.c.l.b16 %v232
      %v332 = vunpack.c.l.b16 %v233
      %v333 = vunpack.c.l.b16 %v234
      %v334 = vunpack.c.l.b16 %v235
      %v335 = vunpack.c.l.b16 %v236
      %v336 = vunpack.c.l.b16 %v237
      %v337 = vunpack.c.l.b16 %v238
      %v338 = vpack.c.b16 %v330, %v329
      %v339 = vpack.c.b16 %v332, %v331
      %v340 = vpack.c.b16 %v334, %v333
      %v341 = vpack.c.b16 %v336, %v335
      %v342 = vpack.c.b16 %v337, %v337
      %v347 = vsel %vm298, %v256, 0
      %v350 = vsel %vm302, %v342, 0
      %352 = vmatpush.bf16.msra.mxu0 0
      %353 = vmatpush.bf16.msra.mxu0 0
      %354 = vmatpush.bf16.msra.mxu0 0
      %355 = vmatpush.bf16.msra.mxu0 %v350
      %356 = vmatpush.bf16.msra.mxu0 %v341
      %357 = vmatpush.bf16.msra.mxu0 %v340
      %358 = vmatpush.bf16.msra.mxu0 %v339
      %359 = vmatpush.bf16.msra.mxu0 %v338
      %360 = vmatmul.bf16.gmra.mxu0 %v347
      %v361 = vpop.f32.mrf.mxu0
      %v362 = vadd.f32 %v316, %v361
      %v363 = vpop.f32.mrf.mxu0
      %v364 = vadd.f32 %v318, %v363
      %365 = vdwg.mxu0
      %v366 = vld [vmem:[%s209] sm:$0xe]
      %s367 = scalar_lea.vmem %s1, 72
      %v368 = vld [vmem:[%s367] sm:$0xf]
      %v369 = vld [vmem:[%s367 + $0x4] sm:$0xf]
      %v370 = vld [vmem:[%s367 + $0x8] sm:$0xf]
      %v371 = vld [vmem:[%s367 + $0xc] sm:$0xf]
      %v372 = vld [vmem:[%s367 + $0x10] sm:$0xf]
      %v373 = vld [vmem:[%s367 + $0x14] sm:$0xf]
      %v374 = vld [vmem:[%s367 + $0x18] sm:$0xf]
      %v375 = vld [vmem:[%s367 + $0x1c] sm:$0xf]
      %v376 = vld [vmem:[%s367 + $0x20] sm:$0xf]
      %v378 = vunpack.c.l.b16 %v366
      %v379 = vpack.c.b16 %v254, %v378
      %vm380 = vcmask 1046528
      %v381 = vrot.slane %v379, 1
      %v382 = vrot.slane %v257, 1
      %v383 = vsel %vm380, %v381, %v382
      %v393 = vunpack.c.l.b16 %v368
      %v394 = vunpack.c.l.b16 %v369
      %v395 = vunpack.c.l.b16 %v370
      %v396 = vunpack.c.l.b16 %v371
      %v397 = vunpack.c.l.b16 %v372
      %v398 = vunpack.c.l.b16 %v373
      %v399 = vunpack.c.l.b16 %v374
      %v400 = vunpack.c.l.b16 %v375
      %v401 = vunpack.c.l.b16 %v376
      %v402 = vpack.c.b16 %v394, %v393
      %v403 = vpack.c.b16 %v396, %v395
      %v404 = vpack.c.b16 %v398, %v397
      %v405 = vpack.c.b16 %v400, %v399
      %v406 = vpack.c.b16 %v401, %v401
      %v412 = vsel %vm298, %v383, 0
      %v415 = vsel %vm302, %v406, 0
      %417 = vmatpush.bf16.msra.mxu0 0
      %418 = vmatpush.bf16.msra.mxu0 0
      %419 = vmatpush.bf16.msra.mxu0 0
      %420 = vmatpush.bf16.msra.mxu0 %v415
      %421 = vmatpush.bf16.msra.mxu0 %v405
      %422 = vmatpush.bf16.msra.mxu0 %v404
      %423 = vmatpush.bf16.msra.mxu0 %v403
      %424 = vmatpush.bf16.msra.mxu0 %v402
      %425 = vmatmul.bf16.gmra.mxu0 %v412
      %v426 = vpop.f32.mrf.mxu0
      %v427 = vadd.f32 0.0, %v426
      %v428 = vpop.f32.mrf.mxu0
      %v429 = vadd.f32 0.0, %v428
      %430 = vdwg.mxu0
      %v431 = vadd.f32 %v362, %v427
      %v432 = vadd.f32 %v364, %v429
      %v433 = vpack.c.bf16 %v431, %v431
      %v434 = vpack.c.bf16 %v432, %v432
      %435 = vst [vmem:[%s218] sm:$0xf] %v433
      %436 = vst [vmem:[%s218 + $0x4] sm:$0xf] %v434
      %v437 = vadd.f32 %v431, %v432
      %v438 = vrot.slane %v437, 4
      %v439 = vadd.f32 %v437, %v438
      %v440 = vrot.slane %v439, 2
      %v441 = vadd.f32 %v439, %v440
      %v442 = vrot.slane %v441, 1
      %v443 = vadd.f32 %v441, %v442
      %v444 = vmul.f32 %v431, %v431
      %v445 = vmul.f32 %v432, %v432
      %v446 = vadd.f32 %v444, %v445
      %v447 = vrot.slane %v446, 4
      %v448 = vadd.f32 %v446, %v447
      %v449 = vrot.slane %v448, 2
      %v450 = vadd.f32 %v448, %v449
      %v451 = vrot.slane %v450, 1
      %v452 = vadd.f32 %v450, %v451
      %vm453 = vcmask 1040384
      %v454 = vsel %vm453, %v443, %v452
      %455 = vst [vmem:[%s226] sm:$0x3] %v454
      %s456 = smul.u32 2, %s20
      %p457 = scmp.lt.s32.totalorder %s19, 1
      %s458 = scalar_select %p457, %s19, 1
      %p459 = scmp.lt.s32.totalorder %s456, 1
      %s460 = scalar_select %p459, %s456, 1
      %s461 = smul.addr %s458, 2
      %s462 = sadd.s32 %s460, %s461
      %s463 = smul.addr %s462, 4
      %s464 = scalar_lea.vmem %s2, %s463
      %p465 = scmp.lt.s32.totalorder %s19, 1
      %s466 = scalar_select %p465, %s19, 1
      %p467 = scmp.lt.s32.totalorder %s20, 0
      %s468 = scalar_select %p467, %s20, 0
      %s469 = sadd.s32 %s468, %s466
      %s470 = smul.addr %s469, 2
      %s471 = scalar_lea.vmem %s3, %s470
      // Predicated region
      $region29: #{conv_bn_relu_forward.2} parent=27 // pred_check
        %p472 = pneg %p96
      $region30: #{conv_bn_relu_forward.2} parent=27 // pred_check_branch
        %474 = sbr.rel (%p472) target = $region32
      $region31: #{conv_bn_relu_forward.2} parent=27 // pred_region
        %s475 = smul.u32 2, %s20
      $region32: #{conv_bn_relu_forward.2} parent=27 // pred_fallthru
        _
      // Predicated region
      $region33: #{conv_bn_relu_forward.2} parent=27 // pred_check
        %p476 = pneg %p124
      $region34: #{conv_bn_relu_forward.2} parent=27 // pred_check_branch
        %478 = sbr.rel (%p476) target = $region36
      $region35: #{conv_bn_relu_forward.2} parent=27 // pred_region
        _
      $region36: #{conv_bn_relu_forward.2} parent=27 // pred_fallthru
        _
    $region28: #{conv_bn_relu_forward.2} parent=5 // pred_fallthru
      _
    %p479 = scmp.le.s32.totalorder 2, %s10
    // Predicated region
    $region37: #{conv_bn_relu_forward.2} parent=5 // pred_check
      %p480 = pneg %p479
    $region38: #{conv_bn_relu_forward.2} parent=5 // pred_check_branch
      %482 = sbr.rel (%p480) target = $region40
    $region39: #{conv_bn_relu_forward.2} parent=5 // pred_region
      %s483 = ssub.s32 %s10, 2
      // Predicated region
      $region41: #{conv_bn_relu_forward.2} parent=39 // pred_check
        %p484 = pneg %p102
      $region42: #{conv_bn_relu_forward.2} parent=39 // pred_check_branch
        %486 = sbr.rel (%p484) target = $region44
      $region43: #{conv_bn_relu_forward.2} parent=39 // pred_region
        %s487 = smul.u32 2, %s22
        %p488 = scmp.lt.s32.totalorder %s21, 1
        %s489 = scalar_select %p488, %s21, 1
        %p490 = scmp.lt.s32.totalorder %s487, 1
        %s491 = scalar_select %p490, %s487, 1
        %s492 = smul.addr %s489, 2
        %s493 = sadd.s32 %s491, %s492
        %s494 = smul.addr %s493, 4
        %s495 = scalar_lea.vmem %s2, %s494
      $region44: #{conv_bn_relu_forward.2} parent=39 // pred_fallthru
        _
      // Predicated region
      $region45: #{conv_bn_relu_forward.2} parent=39 // pred_check
        %p496 = pneg %p130
      $region46: #{conv_bn_relu_forward.2} parent=39 // pred_check_branch
        %498 = sbr.rel (%p496) target = $region48
      $region47: #{conv_bn_relu_forward.2} parent=39 // pred_region
        %p499 = scmp.lt.s32.totalorder %s21, 1
        %s500 = scalar_select %p499, %s21, 1
        %p501 = scmp.lt.s32.totalorder %s22, 0
        %s502 = scalar_select %p501, %s22, 0
        %s503 = sadd.s32 %s502, %s500
        %s504 = smul.addr %s503, 2
        %s505 = scalar_lea.vmem %s3, %s504
      $region48: #{conv_bn_relu_forward.2} parent=39 // pred_fallthru
        _
    $region40: #{conv_bn_relu_forward.2} parent=5 // pred_fallthru
      _
  $region6: #{conv_bn_relu_forward.2} parent=0 // loop_footer
    %s14 = sadd.s32 1, %s10
  $region7: #{conv_bn_relu_forward.2} parent=0 // loop_footer_branch
    %9 = sbr.rel target = $region3
  $region8: #{conv_bn_relu_forward.2} parent=0 // loop_exit
    _

// kernel: tile.13
$region0: #{tile.13}
  #allocation0 [shape = 's32[1]{0}', space=sflag, size = 0x4, scoped, tag = 'scoped memory for tile.13']
  %s0 = inlined_call_operand.vmem [shape: f32[8], index: 0, kind: input, shape index: {}]
  %s1 = inlined_call_operand.vmem [shape: f32[16,8], index: 1, kind: output, shape index: {}]
  // Predicated region
  $region2: #{tile.13} parent=0 // pred_check
    _
  $region3: #{tile.13} parent=0 // pred_check_branch
    %3 = sbr.rel (0) target = $region5
  $region4: #{tile.13} parent=0 // pred_region
    _
  $region5: #{tile.13} parent=0 // pred_fallthru
    _
  %v4 = vld [vmem:[%s0] ss:$0 sm:$0xff]
  %5 = vst [vmem:[%s1] sm:$0xff] %v4
  %s6 = scalar_lea.vmem %s1, 8
  %7 = vst [vmem:[%s6] sm:$0xff] %v4

// kernel: tile.14
$region0: #{tile.14}
  %s0 = inlined_call_operand.vmem [shape: f32[16,8], index: 0, kind: input, shape index: {}]
  %s1 = inlined_call_operand.vmem [shape: f32[1,128], index: 1, kind: output, shape index: {}]
  $region1: #{tile.14} parent=0
    #allocation0 [shape = 'u8[4096]{0}', space=vmem, size = 0x1000, scoped, tag = 'scoped mem for output reshape']
    %v2 = vld [vmem:[%s0] sm:$0x1]
    %vm3 = vcmask 64512
    %4 = vst.msk [vmem:[#allocation0] sm:$0x1] %vm3, %v2
    %s5 = scalar_lea.vmem %s0, 15
    %v6 = vld [vmem:[%s5] sm:$0x1]
    %7 = vrot.lane.b32.xlu0 %v6, 120
    %v8 = vpop.permute.xlu0 %7
    %vm9 = vcmask 1048512
    %10 = vst.msk [vmem:[#allocation0] sm:$0x1] %vm9, %v8
    %s11 = scalar_lea.vmem %s0, 14
    %v12 = vld [vmem:[%s11] sm:$0x1]
    %13 = vrot.lane.b32.xlu0 %v12, 112
    %v14 = vpop.permute.xlu0 %13
    %vm15 = vcmask 982912
    %16 = vst.msk [vmem:[#allocation0] sm:$0x1] %vm15, %v14
    %s17 = scalar_lea.vmem %s0, 13
    %v18 = vld [vmem:[%s17] sm:$0x1]
    %19 = vrot.lane.b32.xlu0 %v18, 104
    %v20 = vpop.permute.xlu0 %19
    %vm21 = vcmask 917312
    %22 = vst.msk [vmem:[#allocation0] sm:$0x1] %vm21, %v20
    %s23 = scalar_lea.vmem %s0, 12
    %v24 = vld [vmem:[%s23] sm:$0x1]
    %25 = vrot.lane.b32.xlu0 %v24, 96
    %v26 = vpop.permute.xlu0 %25
    %vm27 = vcmask 851712
    %28 = vst.msk [vmem:[#allocation0] sm:$0x1] %vm27, %v26
    %s29 = scalar_lea.vmem %s0, 11
    %v30 = vld [vmem:[%s29] sm:$0x1]
    %31 = vrot.lane.b32.xlu0 %v30, 88
    %v32 = vpop.permute.xlu0 %31
    %vm33 = vcmask 786112
    %34 = vst.msk [vmem:[#allocation0] sm:$0x1] %vm33, %v32
    %s35 = scalar_lea.vmem %s0, 10
    %v36 = vld [vmem:[%s35] sm:$0x1]
    %37 = vrot.lane.b32.xlu0 %v36, 80
    %v38 = vpop.permute.xlu0 %37
    %vm39 = vcmask 720512
    %40 = vst.msk [vmem:[#allocation0] sm:$0x1] %vm39, %v38
    %s41 = scalar_lea.vmem %s0, 9
    %v42 = vld [vmem:[%s41] sm:$0x1]
    %43 = vrot.lane.b32.xlu0 %v42, 72
    %v44 = vpop.permute.xlu0 %43
    %vm45 = vcmask 654912
    %46 = vst.msk [vmem:[#allocation0] sm:$0x1] %vm45, %v44
    %s47 = scalar_lea.vmem %s0, 8
    %v48 = vld [vmem:[%s47] sm:$0x1]
    %49 = vrot.lane.b32.xlu0 %v48, 64
    %v50 = vpop.permute.xlu0 %49
    %vm51 = vcmask 589312
    %52 = vst.msk [vmem:[#allocation0] sm:$0x1] %vm51, %v50
    %s53 = scalar_lea.vmem %s0, 7
    %v54 = vld [vmem:[%s53] sm:$0x1]
    %55 = vrot.lane.b32.xlu0 %v54, 56
    %v56 = vpop.permute.xlu0 %55
    %vm57 = vcmask 523712
    %58 = vst.msk [vmem:[#allocation0] sm:$0x1] %vm57, %v56
    %s59 = scalar_lea.vmem %s0, 6
    %v60 = vld [vmem:[%s59] sm:$0x1]
    %61 = vrot.lane.b32.xlu0 %v60, 48
    %v62 = vpop.permute.xlu0 %61
    %vm63 = vcmask 458112
    %64 = vst.msk [vmem:[#allocation0] sm:$0x1] %vm63, %v62
    %s65 = scalar_lea.vmem %s0, 5
    %v66 = vld [vmem:[%s65] sm:$0x1]
    %67 = vrot.lane.b32.xlu0 %v66, 40
    %v68 = vpop.permute.xlu0 %67
    %vm69 = vcmask 392512
    %70 = vst.msk [vmem:[#allocation0] sm:$0x1] %vm69, %v68
    %s71 = scalar_lea.vmem %s0, 4
    %v72 = vld [vmem:[%s71] sm:$0x1]
    %73 = vrot.lane.b32.xlu0 %v72, 32
    %v74 = vpop.permute.xlu0 %73
    %vm75 = vcmask 326912
    %76 = vst.msk [vmem:[#allocation0] sm:$0x1] %vm75, %v74
    %s77 = scalar_lea.vmem %s0, 3
    %v78 = vld [vmem:[%s77] sm:$0x1]
    %79 = vrot.lane.b32.xlu0 %v78, 24
    %v80 = vpop.permute.xlu0 %79
    %vm81 = vcmask 261312
    %82 = vst.msk [vmem:[#allocation0] sm:$0x1] %vm81, %v80
    %s83 = scalar_lea.vmem %s0, 2
    %v84 = vld [vmem:[%s83] sm:$0x1]
    %85 = vrot.lane.b32.xlu0 %v84, 16
    %v86 = vpop.permute.xlu0 %85
    %vm87 = vcmask 195712
    %88 = vst.msk [vmem:[#allocation0] sm:$0x1] %vm87, %v86
    %s89 = scalar_lea.vmem %s0, 1
    %v90 = vld [vmem:[%s89] sm:$0x1]
    %91 = vrot.lane.b32.xlu0 %v90, 8
    %v92 = vpop.permute.xlu0 %91
    %vm93 = vcmask 130112
    %94 = vst.msk [vmem:[#allocation0] sm:$0x1] %vm93, %v92
    %s96 = ssub.s32 2, 1
    %v97 = vld [vmem:[#allocation0] sm:%s96]
    %s99 = ssub.s32 2, 1
    %100 = vst [vmem:[%s1] sm:%s99] %v97

// kernel: conv_bn_relu_forward.3
$region0: #{conv_bn_relu_forward.3}
  #allocation0 [shape = 'u32[]', space=smem, size = 0x4, offset = 0x4, fixed_abs, tag = 'smem constant byte address 0x4 - core index']
  #allocation1 [shape = 'u32[72,128]{1,0:T(1,128)}', space=vmem, size = 0x9000, scoped, tag = 'internal scratch']
  %s0 = inlined_call_operand.vmem [shape: bf16[2,16,128], index: 0, kind: input, shape index: {}]
  %s1 = inlined_call_operand.vmem [shape: f32[1,128], index: 1, kind: input, shape index: {}]
  %s2 = inlined_call_operand.vmem [shape: f32[1,128], index: 2, kind: input, shape index: {}]
  %s3 = inlined_call_operand.vmem [shape: f32[2,16,128], index: 3, kind: output, shape index: {}]
  %s4 = sld [smem:[#allocation0]]
  $region45: #{conv_bn_relu_forward.3} parent=0
    _
  %s6 = ssub.s32 1, %s4
  %s7 = scalar_select 0, %s6, %s4
  loop: start=0, step=1, limit=4
  $region2: #{conv_bn_relu_forward.3} parent=0 // loop_pre_header
    _
  $region3: #{conv_bn_relu_forward.3} parent=0 // loop_header
    %s9 = sphi 0, %s13
    %p10 = scmp.ge.s32.totalorder %s9, 4
    %s16 = sphi 0, %s28
    %s17 = sphi 0, %s24
    %s18 = sphi 0, %s16
    %s19 = sphi 0, %s17
    %s20 = sphi 0, %s18
    %s21 = sphi 0, %s19
    %s33 = sphi 0, %s35
    %s36 = sphi 0, %s33
    %s37 = sphi 0, %s36
    %s53 = sphi 0, %s37
    %s57 = sphi 0, %s57
    %s59 = sphi 0, %s57
    %s60 = sphi 0, %s59
    %s74 = sphi 0, %s60
    %s78 = sphi 0, %s78
    %s80 = sphi 0, %s78
    %s81 = sphi 0, %s80
    %s95 = sphi 0, %s81
    %s103 = sphi 0, %s105
    %s106 = sphi 0, %s103
    %s107 = sphi 0, %s106
    %s123 = sphi 0, %s107
  $region4: #{conv_bn_relu_forward.3} parent=0 // loop_header_branch
    %12 = sbr.rel (%p10) target = $region8
  $region5: #{conv_bn_relu_forward.3} parent=0 // loop_body
    %s14 = ssub.s32 %s9, 1
    %s15 = ssub.s32 %s9, 2
    %s22 = sadd.s32 1, %s17
    %p23 = scmp.ge.s32.totalorder %s22, 1
    %s24 = scalar_select %p23, 0, %s22
    %s25 = sadd.s32 1, %s16
    %s26 = scalar_select %p23, %s25, %s16
    %p27 = scmp.ge.s32.totalorder %s26, 2
    %s28 = scalar_select %p27, 0, %s26
    %s29 = ssub.s32 %s16, %s28
    %s30 = ssub.s32 %s17, %s24
    %s31 = sor.u32 %s29, %s30
    %p32 = scmp.eq.s32.totalorder %s31, 0
    %s34 = sadd.s32 %s33, 1
    %s35 = scalar_select %p32, %s33, %s34
    %p38 = pneg %p32
    %p39 = scmp.eq.s32.totalorder %s9, 1
    %p40 = por %p38, %p39
    %p41 = scmp.ne.s32.totalorder %s33, %s36
    %p42 = scmp.eq.s32.totalorder %s9, 0
    %p43 = por %p41, %p42
    %p44 = scmp.ne.s32.totalorder %s33, %s36
    %p45 = scmp.eq.s32.totalorder %s14, 1
    %p46 = por %p44, %p45
    %p47 = scmp.ne.s32.totalorder %s36, %s37
    %p48 = scmp.eq.s32.totalorder %s14, 0
    %p49 = por %p47, %p48
    %p50 = scmp.ne.s32.totalorder %s36, %s37
    %p51 = scmp.eq.s32.totalorder %s15, 1
    %p52 = por %p50, %p51
    %p54 = scmp.ne.s32.totalorder %s37, %s53
    %p55 = scmp.eq.s32.totalorder %s15, 0
    %p56 = por %p54, %p55
    %s58 = sadd.s32 %s57, 1
    %p61 = scmp.eq.s32.totalorder %s9, 1
    %p62 = scmp.ne.s32.totalorder %s57, %s59
    %p63 = scmp.eq.s32.totalorder %s9, 0
    %p64 = por %p62, %p63
    %p65 = scmp.ne.s32.totalorder %s57, %s59
    %p66 = scmp.eq.s32.totalorder %s14, 1
    %p67 = por %p65, %p66
    %p68 = scmp.ne.s32.totalorder %s59, %s60
    %p69 = scmp.eq.s32.totalorder %s14, 0
    %p70 = por %p68, %p69
    %p71 = scmp.ne.s32.totalorder %s59, %s60
    %p72 = scmp.eq.s32.totalorder %s15, 1
    %p73 = por %p71, %p72
    %p75 = scmp.ne.s32.totalorder %s60, %s74
    %p76 = scmp.eq.s32.totalorder %s15, 0
    %p77 = por %p75, %p76
    %s79 = sadd.s32 %s78, 1
    %p82 = scmp.eq.s32.totalorder %s9, 1
    %p83 = scmp.ne.s32.totalorder %s78, %s80
    %p84 = scmp.eq.s32.totalorder %s9, 0
    %p85 = por %p83, %p84
    %p86 = scmp.ne.s32.totalorder %s78, %s80
    %p87 = scmp.eq.s32.totalorder %s14, 1
    %p88 = por %p86, %p87
    %p89 = scmp.ne.s32.totalorder %s80, %s81
    %p90 = scmp.eq.s32.totalorder %s14, 0
    %p91 = por %p89, %p90
    %p92 = scmp.ne.s32.totalorder %s80, %s81
    %p93 = scmp.eq.s32.totalorder %s15, 1
    %p94 = por %p92, %p93
    %p96 = scmp.ne.s32.totalorder %s81, %s95
    %p97 = scmp.eq.s32.totalorder %s15, 0
    %p98 = por %p96, %p97
    %s99 = ssub.s32 %s16, %s28
    %s100 = ssub.s32 %s17, %s24
    %s101 = sor.u32 %s99, %s100
    %p102 = scmp.eq.s32.totalorder %s101, 0
    %s104 = sadd.s32 %s103, 1
    %s105 = scalar_select %p102, %s103, %s104
    %p108 = pneg %p102
    %p109 = scmp.eq.s32.totalorder %s9, 1
    %p110 = por %p108, %p109
    %p111 = scmp.ne.s32.totalorder %s103, %s106
    %p112 = scmp.eq.s32.totalorder %s9, 0
    %p113 = por %p111, %p112
    %p114 = scmp.ne.s32.totalorder %s103, %s106
    %p115 = scmp.eq.s32.totalorder %s14, 1
    %p116 = por %p114, %p115
    %p117 = scmp.ne.s32.totalorder %s106, %s107
    %p118 = scmp.eq.s32.totalorder %s14, 0
    %p119 = por %p117, %p118
    %p120 = scmp.ne.s32.totalorder %s106, %s107
    %p121 = scmp.eq.s32.totalorder %s15, 1
    %p122 = por %p120, %p121
    %p124 = scmp.ne.s32.totalorder %s107, %s123
    %p125 = scmp.eq.s32.totalorder %s15, 0
    %p126 = por %p124, %p125
    %p127 = scmp.le.s32.totalorder 1, %s9
    %p128 = scmp.lt.s32.totalorder %s9, 3
    %p129 = pnand %p127, %p128
    %p130 = pneg %p129
    // Predicated region
    $region9: #{conv_bn_relu_forward.3} parent=5 // pred_check
      _
    $region10: #{conv_bn_relu_forward.3} parent=5 // pred_check_branch
      %132 = sbr.rel (%p129) target = $region12
    $region11: #{conv_bn_relu_forward.3} parent=5 // pred_region
      %s133 = ssub.s32 %s9, 1
      // Predicated region
      $region13: #{conv_bn_relu_forward.3} parent=11 // pred_check
        %p134 = pneg %p70
      $region14: #{conv_bn_relu_forward.3} parent=11 // pred_check_branch
        %136 = sbr.rel (%p134) target = $region16
      $region15: #{conv_bn_relu_forward.3} parent=11 // pred_region
        _
      $region16: #{conv_bn_relu_forward.3} parent=11 // pred_fallthru
        _
      // Predicated region
      $region17: #{conv_bn_relu_forward.3} parent=11 // pred_check
        %p137 = pneg %p91
      $region18: #{conv_bn_relu_forward.3} parent=11 // pred_check_branch
        %139 = sbr.rel (%p137) target = $region20
      $region19: #{conv_bn_relu_forward.3} parent=11 // pred_region
        _
      $region20: #{conv_bn_relu_forward.3} parent=11 // pred_fallthru
        _
    $region12: #{conv_bn_relu_forward.3} parent=5 // pred_fallthru
      _
    %p140 = scmp.lt.s32.totalorder %s9, 2
    // Predicated region
    $region21: #{conv_bn_relu_forward.3} parent=5 // pred_check
      %p141 = pneg %p140
    $region22: #{conv_bn_relu_forward.3} parent=5 // pred_check_branch
      %143 = sbr.rel (%p141) target = $region24
    $region23: #{conv_bn_relu_forward.3} parent=5 // pred_region
      // Predicated region
      $region25: #{conv_bn_relu_forward.3} parent=23 // pred_check
        %p144 = pneg %p43
      $region26: #{conv_bn_relu_forward.3} parent=23 // pred_check_branch
        %146 = sbr.rel (%p144) target = $region28
      $region27: #{conv_bn_relu_forward.3} parent=23 // pred_region
        %s147 = smul.u32 2, %s17
        %p148 = scmp.lt.s32.totalorder %s16, 1
        %s149 = scalar_select %p148, %s16, 1
        %p150 = scmp.lt.s32.totalorder %s147, 1
        %s151 = scalar_select %p150, %s147, 1
        %s152 = smul.addr %s149, 2
        %s153 = sadd.s32 %s151, %s152
        %s154 = smul.addr %s153, 4
        %s155 = scalar_lea.vmem %s0, %s154
        %s156 = smul.u32 2, %s17
      $region28: #{conv_bn_relu_forward.3} parent=23 // pred_fallthru
        _
    $region24: #{conv_bn_relu_forward.3} parent=5 // pred_fallthru
      _
    %p157 = scmp.le.s32.totalorder 1, %s9
    %p158 = scmp.lt.s32.totalorder %s9, 3
    %p159 = pnand %p157, %p158
    %p160 = pneg %p159
    // Predicated region
    $region29: #{conv_bn_relu_forward.3} parent=5 // pred_check
      _
    $region30: #{conv_bn_relu_forward.3} parent=5 // pred_check_branch
      %162 = sbr.rel (%p159) target = $region32
    $region31: #{conv_bn_relu_forward.3} parent=5 // pred_region
      %s163 = ssub.s32 %s9, 1
      %s164 = smul.u32 2, %s19
      %p165 = scmp.lt.s32.totalorder %s18, 1
      %s166 = scalar_select %p165, %s18, 1
      %p167 = scmp.lt.s32.totalorder %s164, 1
      %s168 = scalar_select %p167, %s164, 1
      %s169 = smul.addr %s166, 2
      %s170 = sadd.s32 %s168, %s169
      %s171 = smul.addr %s170, 4
      %s172 = scalar_lea.vmem %s0, %s171
      %p173 = pneg %p49
      %p174 = pneg %p46
      %p175 = pneg %p70
      %p176 = pneg %p67
      %p177 = pneg %p91
      %p178 = pneg %p88
      %p179 = pneg %p119
      %p180 = pneg %p116
      %s181 = smul.u32 2, %s19
      %p182 = scmp.lt.s32.totalorder %s18, 1
      %s183 = scalar_select %p182, %s18, 1
      %p184 = scmp.lt.s32.totalorder %s181, 1
      %s185 = scalar_select %p184, %s181, 1
      %s186 = smul.addr %s183, 2
      %s187 = sadd.s32 %s185, %s186
      %s188 = smul.addr %s187, 8
      %s189 = scalar_lea.vmem %s3, %s188
      %s190 = smul.u32 2, %s19
      %p191 = scmp.lt.s32.totalorder %s18, 1
      %s192 = scalar_select %p191, %s18, 1
      %p193 = scmp.lt.s32.totalorder %s190, 1
      %s194 = scalar_select %p193, %s190, 1
      %s195 = smul.addr %s192, 2
      %s196 = sadd.s32 %s194, %s195
      %s197 = smul.addr %s196, 4
      %s198 = scalar_lea.vmem %s0, %s197
      %s199 = smul.u32 2, %s19
      %s200 = smul.u32 2, %s19
      %p201 = scmp.lt.s32.totalorder %s18, 1
      %s202 = scalar_select %p201, %s18, 1
      %p203 = scmp.lt.s32.totalorder %s200, 1
      %s204 = scalar_select %p203, %s200, 1
      %s205 = smul.addr %s202, 2
      %s206 = sadd.s32 %s204, %s205
      %s207 = smul.addr %s206, 8
      %s208 = scalar_lea.vmem %s3, %s207
      %s209 = smul.u32 2, %s19
      %v210 = vld [vmem:[%s198] sm:$0xf]
      %v211 = vld [vmem:[%s198 + $0x4] sm:$0xf]
      %v212 = vunpack.c.l.bf16 %v210
      %v213 = vunpack.c.l.bf16 %v211
      %v214 = vld [vmem:[%s1] sm:$0x1]
      %v216 = vperm.slane %v214, 0
      %v218 = vmul.f32 %v212, %v216
      %v219 = vmul.f32 %v213, %v216
      %v220 = vld [vmem:[%s2] sm:$0x1]
      %v222 = vperm.slane %v220, 0
      %v224 = vadd.f32 %v218, %v222
      %v225 = vadd.f32 %v219, %v222
      %v226 = vmax.f32 %v224, 0.0
      %v227 = vmax.f32 %v225, 0.0
      %228 = vst [vmem:[%s208] sm:$0xff] %v226
      %229 = vst [vmem:[%s208 + $0x8] sm:$0xff] %v227
      %s230 = smul.u32 2, %s19
      %p231 = scmp.lt.s32.totalorder %s18, 1
      %s232 = scalar_select %p231, %s18, 1
      %p233 = scmp.lt.s32.totalorder %s230, 1
      %s234 = scalar_select %p233, %s230, 1
      %s235 = smul.addr %s232, 2
      %s236 = sadd.s32 %s234, %s235
      %s237 = smul.addr %s236, 8
      %s238 = scalar_lea.vmem %s3, %s237
      // Predicated region
      $region33: #{conv_bn_relu_forward.3} parent=31 // pred_check
        %p239 = pneg %p116
      $region34: #{conv_bn_relu_forward.3} parent=31 // pred_check_branch
        %241 = sbr.rel (%p239) target = $region36
      $region35: #{conv_bn_relu_forward.3} parent=31 // pred_region
        %s242 = smul.u32 2, %s19
      $region36: #{conv_bn_relu_forward.3} parent=31 // pred_fallthru
        _
    $region32: #{conv_bn_relu_forward.3} parent=5 // pred_fallthru
      _
    %p243 = scmp.le.s32.totalorder 2, %s9
    // Predicated region
    $region37: #{conv_bn_relu_forward.3} parent=5 // pred_check
      %p244 = pneg %p243
    $region38: #{conv_bn_relu_forward.3} parent=5 // pred_check_branch
      %246 = sbr.rel (%p244) target = $region40
    $region39: #{conv_bn_relu_forward.3} parent=5 // pred_region
      %s247 = ssub.s32 %s9, 2
      // Predicated region
      $region41: #{conv_bn_relu_forward.3} parent=39 // pred_check
        %p248 = pneg %p122
      $region42: #{conv_bn_relu_forward.3} parent=39 // pred_check_branch
        %250 = sbr.rel (%p248) target = $region44
      $region43: #{conv_bn_relu_forward.3} parent=39 // pred_region
        %s251 = smul.u32 2, %s21
        %p252 = scmp.lt.s32.totalorder %s20, 1
        %s253 = scalar_select %p252, %s20, 1
        %p254 = scmp.lt.s32.totalorder %s251, 1
        %s255 = scalar_select %p254, %s251, 1
        %s256 = smul.addr %s253, 2
        %s257 = sadd.s32 %s255, %s256
        %s258 = smul.addr %s257, 8
        %s259 = scalar_lea.vmem %s3, %s258
      $region44: #{conv_bn_relu_forward.3} parent=39 // pred_fallthru
        _
    $region40: #{conv_bn_relu_forward.3} parent=5 // pred_fallthru
      _
  $region6: #{conv_bn_relu_forward.3} parent=0 // loop_footer
    %s13 = sadd.s32 1, %s9
  $region7: #{conv_bn_relu_forward.3} parent=0 // loop_footer_branch
    %8 = sbr.rel target = $region3
  $region8: #{conv_bn_relu_forward.3} parent=0 // loop_exit
    _

</llo_original>
